<compile_context>
chip_gen: v7x
topology: tpu7x:2x2x1
jax: 0.10.0
libtpu: 0.0.40
codegen_flags: <defaults>
</compile_context>

<pallas_src>
import jax
import jax.numpy as jnp
from jax.experimental import pallas as pl
from jax.experimental.pallas import tpu as pltpu


def _round_up(x: int, m: int) -> int:
    return ((x + m - 1) // m) * m


def decoder_kernel(x_ref, w_ref, b_ref, o_ref):
    """One lane-dense tile of y = sigmoid(x_packed @ W_blk + b_blk).

    x_ref: [tbg, G*F] f32  packed input rows (G original rows per packed row), streamed
    w_ref: [G*F, G*O] f32  block-diagonal packed weight, VMEM-resident across the grid
    b_ref: [1,  G*O]  f32  tiled bias, VMEM-resident
    o_ref: [tbg, G*O] f32  packed output rows; G*O >= 128 -> unmasked full-lane stores
    """
    # MXU matmul with f32 accumulation; the MXU is ~1-2% utilized and that is fine —
    # the kernel is HBM-DMA bound (do not reblock F/O to "feed the MXU better").
    z = jnp.dot(x_ref[...], w_ref[...], preferred_element_type=jnp.float32)
    o_ref[...] = jax.nn.sigmoid(z + b_ref[...])   # bias add on VPU, exp on EUP: free slots


def decoder_forward(x, w_pt, b, *, block_b=8192):
    """Pallas TPU forward for `Decoder`: sigmoid(x @ W^T + b).

    x:    [B, F] float32
    w_pt: [O, F] float32 (PyTorch nn.Linear weight layout)
    b:    [O]    float32
    returns [B, O] float32

    block_b ~ batch rows per grid step; tune ~4096 (v5e), ~8192 (v6e), ~16384 (v7x).
    """
    B, F = x.shape
    O = w_pt.shape[0]

    # Rows packed per lane-dense output row: G*O >= 128 (exactly 128 for O=8).
    G = max(1, -(-128 // O))

    # Align the row count to the packing factor. This is at most G-1 extra rows; jnp.pad
    # copies x, so large-batch callers should keep B % G == 0 (for B % G == 0 it is free).
    b_al = _round_up(B, G)
    if b_al != B:
        x = jnp.pad(x, ((0, b_al - B), (0, 0)))
    Bg = b_al // G
    xg = x.reshape(Bg, G * F)                 # free row-major reshape: no HBM pass

    # Block-diagonal packed weight / tiled bias (tiny, built once, VMEM-resident):
    #   W_blk[r*F+f, r*O+o] = W[o, f]  ;  b_blk[0, r*O+o] = b[o]
    w_blk = jnp.kron(jnp.eye(G, dtype=w_pt.dtype), jnp.transpose(w_pt))   # [G*F, G*O]
    b_blk = jnp.tile(b.astype(jnp.float32), G).reshape(1, G * O)          # [1,   G*O]

    # Tile size in packed rows (sublane-aligned). Big tiles amortize the ~0.35us/step
    # overhead; double-buffered VMEM footprint stays tiny at these sizes.
    tbg = min(_round_up(max(1, block_b // G), 8), _round_up(Bg, 8))
    # Keep >= 2 grid steps when the batch allows it so both v7x TensorCores get work.
    if tbg >= Bg and Bg > 16:
        tbg = max(8, _round_up(pl.cdiv(Bg, 2), 8))
    grid = (pl.cdiv(Bg, tbg),)                # ragged last tile handled by Pallas

    out = pl.pallas_call(
        decoder_kernel,
        out_shape=jax.ShapeDtypeStruct((Bg, G * O), jnp.float32),
        grid_spec=pl.GridSpec(
            grid=grid,
            in_specs=[
                pl.BlockSpec((tbg, G * F), lambda i: (i, 0)),   # x: streamed over batch
                pl.BlockSpec((G * F, G * O), lambda i: (0, 0)), # W_blk: VMEM-resident
                pl.BlockSpec((1, G * O), lambda i: (0, 0)),     # bias:  VMEM-resident
            ],
            out_specs=pl.BlockSpec((tbg, G * O), lambda i: (i, 0)),
        ),
        compiler_params=pltpu.CompilerParams(
            dimension_semantics=("parallel",),                  # batch axis -> megacore
        ),
    )(xg, w_blk, b_blk)

    # Free row-major reshape back to [B, O]; slice drops the G-alignment rows.
    return out.reshape(b_al, O)[:B]


if __name__ == "__main__":
    # Sizes implied by the module:
    #   in_features  = len(wickelfeatures) + len(all_phones)
    #   out_features = len(all_phones)
    n_wickel = 24
    n_phones = 8
    in_features = n_wickel + n_phones     # 32
    out_features = n_phones               # 8

    key = jax.random.PRNGKey(0)
    kx, kw, kb = jax.random.split(key, 3)

    # Deterministic params mimicking PyTorch nn.Linear init: U(-1/sqrt(F), 1/sqrt(F))
    bound = 1.0 / jnp.sqrt(jnp.float32(in_features))
    w_pt = jax.random.uniform(kw, (out_features, in_features), jnp.float32, -bound, bound)
    b = jax.random.uniform(kb, (out_features,), jnp.float32, -bound, bound)

    # 304: group-aligned path (no pad); 300: ragged path (pads 4 rows, sliced off).
    # Both exercise a multi-step grid with a ragged final tile.
    for batch in (304, 300):
        x = jax.random.normal(jax.random.fold_in(kx, batch), (batch, in_features),
                              jnp.float32)
        y = jax.block_until_ready(decoder_forward(x, w_pt, b))

        # f32 reference (high-precision matmul so the check only sees kernel error).
        z_ref = jnp.einsum("bf,of->bo", x, w_pt,
                           precision=jax.lax.Precision.HIGHEST) + b[None, :]
        y_ref = jax.nn.sigmoid(z_ref)

        assert y.shape == (batch, out_features)
        assert y.dtype == jnp.float32
        assert jnp.allclose(y, y_ref, atol=2e-3, rtol=2e-3), \
            float(jnp.max(jnp.abs(y - y_ref)))

    print("KERNEL_OK")
</pallas_src>

<mosaic_0001>
module attributes {stable_mosaic.version = 11 : i64} {
  func.func @decoder_kernel(%arg0: i32, %arg1: memref<16x512xf32, #tpu.memory_space<vmem>>, %arg2: memref<512x128xf32, #tpu.memory_space<vmem>>, %arg3: memref<1x128xf32, #tpu.memory_space<vmem>>, %arg4: memref<16x128xf32, #tpu.memory_space<vmem>>) attributes {dimension_semantics = [#tpu.dimension_semantics<parallel>], iteration_bounds = array<i64: 2>, scalar_prefetch = 0 : i64, scratch_operands = 0 : i64, tpu.core_type = #tpu.core_type<tc>, window_params = [{transform_indices = @transform_0, window_bounds = array<i64: 16, 512>}, {pipeline_mode = #tpu.pipeline_mode<synchronous>, transform_indices = @transform_1, window_bounds = array<i64: 512, 128>}, {pipeline_mode = #tpu.pipeline_mode<synchronous>, transform_indices = @transform_2, window_bounds = array<i64: 1, 128>}, {transform_indices = @transform_3, window_bounds = array<i64: 16, 128>}]} {
    %c0 = arith.constant 0 : index
    %c0_0 = arith.constant 0 : index
    %0 = vector.load %arg1[%c0, %c0_0] : memref<16x512xf32, #tpu.memory_space<vmem>>, vector<16x512xf32>
    %c0_1 = arith.constant 0 : index
    %c0_2 = arith.constant 0 : index
    %1 = vector.load %arg2[%c0_1, %c0_2] : memref<512x128xf32, #tpu.memory_space<vmem>>, vector<512x128xf32>
    %cst = arith.constant dense<0.000000e+00> : vector<16x128xf32>
    %2 = tpu.matmul %0, %1, %cst {dimension_numbers = #tpu.dot_dimension_numbers<[1], [0], [0], [1], [0, 0, 1, 1], [], []>} : vector<16x512xf32>, vector<512x128xf32>, vector<16x128xf32> -> vector<16x128xf32>
    %c0_3 = arith.constant 0 : index
    %c0_4 = arith.constant 0 : index
    %3 = vector.load %arg3[%c0_3, %c0_4] : memref<1x128xf32, #tpu.memory_space<vmem>>, vector<1x128xf32>
    %4 = vector.broadcast %3 : vector<1x128xf32> to vector<16x128xf32>
    %5 = arith.addf %2, %4 : vector<16x128xf32>
    %6 = arith.negf %5 : vector<16x128xf32>
    %7 = math.exp %6 : vector<16x128xf32>
    %cst_5 = arith.constant 1.000000e+00 : f32
    %8 = vector.broadcast %cst_5 : f32 to vector<16x128xf32>
    %9 = arith.addf %8, %7 : vector<16x128xf32>
    %10 = arith.divf %8, %9 : vector<16x128xf32>
    %c0_6 = arith.constant 0 : index
    %c0_7 = arith.constant 0 : index
    %11 = vector.load %arg4[%c0_6, %c0_7] : memref<16x128xf32, #tpu.memory_space<vmem>>, vector<16x128xf32>
    tpu.vector_store %arg4[%c0_6, %c0_7], %10 {strides = array<i32>} : memref<16x128xf32, #tpu.memory_space<vmem>>, vector<16x128xf32>,
    return
  }
  func.func @transform_0(%arg0: i32) -> (i32, i32) {
    %c0_i32 = arith.constant 0 : i32
    %c0_i32_0 = arith.constant 0 : i32
    return %arg0, %c0_i32 : i32, i32
  }
  func.func @transform_1(%arg0: i32) -> (i32, i32) {
    %c0_i32 = arith.constant 0 : i32
    %c0_i32_0 = arith.constant 0 : i32
    %c0_i32_1 = arith.constant 0 : i32
    return %c0_i32, %c0_i32_0 : i32, i32
  }
  func.func @transform_2(%arg0: i32) -> (i32, i32) {
    %c0_i32 = arith.constant 0 : i32
    %c0_i32_0 = arith.constant 0 : i32
    %c0_i32_1 = arith.constant 0 : i32
    return %c0_i32, %c0_i32_0 : i32, i32
  }
  func.func @transform_3(%arg0: i32) -> (i32, i32) {
    %c0_i32 = arith.constant 0 : i32
    %c0_i32_0 = arith.constant 0 : i32
    return %arg0, %c0_i32 : i32, i32
  }
}

</mosaic_0001>

<llo_original>
// kernel: tpu_custom_call.1
$region0: #{tpu_custom_call.1}
  #allocation0 [shape = 'u32[]', space=smem, size = 0x4, offset = 0x4, fixed_abs, tag = 'smem constant byte address 0x4 - core index']
  #allocation1 [shape = 'u32[144,128]{1,0:T(1,128)}', space=vmem, size = 0x12000, scoped, tag = 'internal scratch']
  %s0 = inlined_call_operand.hbm [shape: f32[19,512], index: 0, kind: input, shape index: {}]
  %s1 = inlined_call_operand.hbm [shape: f32[512,128], index: 1, kind: input, shape index: {}]
  %s2 = inlined_call_operand.vmem [shape: f32[1,128], index: 2, kind: input, shape index: {}]
  %s3 = inlined_call_operand.hbm [shape: f32[19,128], index: 3, kind: output, shape index: {}]
  %s4 = sld [smem:[#allocation0]]
  $region53: #{tpu_custom_call.1} parent=0
    _
  %s6 = ssub.s32 1, %s4
  %s7 = scalar_select 0, %s6, %s4
  $region1: #{tpu_custom_call.1} parent=0
    #allocation2 [shape = 'u8[65536]{0}', space=vmem, size = 0x10000, scoped, tag = 'input window, operand 0']
    #allocation3 [shape = 's32[2]{0}', space=sflag, size = 0x8, scoped, tag = 'scoped memory for tpu_custom_call.1']
    #allocation4 [shape = 's32[2]{0}', space=sflag, size = 0x8, scoped, tag = 'scoped memory for tpu_custom_call.1']
    #allocation5 [shape = 'u8[262144]{0}', space=vmem, size = 0x40000, scoped, tag = 'input window, operand 1, single buffered']
    #allocation6 [shape = 's32[1]{0}', space=sflag, size = 0x4, scoped, tag = 'scoped memory for tpu_custom_call.1']
    #allocation7 [shape = 'u8[16384]{0}', space=vmem, size = 0x4000, scoped, tag = 'output window, operand 0']
    %8 = vsyncpa [#allocation3], 0
    %s9 = scalar_lea.sflag [#allocation3], 1
    %10 = vsyncpa %s9, 0
    %11 = vsyncpa [#allocation6], 0
    %12 = vsyncpa [#allocation4], 0
    %s13 = scalar_lea.sflag [#allocation4], 1
    %14 = vsyncpa %s13, 0
    loop: start=0, step=1, limit=4
    $region2: #{tpu_custom_call.1} parent=1 // loop_pre_header
      _
    $region3: #{tpu_custom_call.1} parent=1 // loop_header
      %s16 = sphi 0, %s20
      %p17 = scmp.ge.s32.totalorder %s16, 4
      %s26 = sphi 0, %s28
      %s29 = sphi 0, %s26
      %s30 = sphi 0, %s29
      %s46 = sphi 0, %s30
      %s50 = sphi 0, %s50
      %s52 = sphi 0, %s50
      %s53 = sphi 0, %s52
      %s67 = sphi 0, %s53
      %s71 = sphi 0, %s71
      %s73 = sphi 0, %s71
      %s74 = sphi 0, %s73
      %s88 = sphi 0, %s74
      %s94 = sphi 0, %s96
      %s97 = sphi 0, %s94
      %s98 = sphi 0, %s97
      %s114 = sphi 0, %s98
    $region4: #{tpu_custom_call.1} parent=1 // loop_header_branch
      %19 = sbr.rel (%p17) target = $region8
    $region5: #{tpu_custom_call.1} parent=1 // loop_body
      %s21 = ssub.s32 %s16, 1
      %s22 = ssub.s32 %s16, 2
      %s23 = sadd.s32 %s16, 1
      %s24 = ssub.s32 %s16, %s23
      %p25 = scmp.eq.s32.totalorder %s24, 0
      %s27 = sadd.s32 %s26, 1
      %s28 = scalar_select %p25, %s26, %s27
      %p31 = pneg %p25
      %p32 = scmp.eq.s32.totalorder %s16, 1
      %p33 = por %p31, %p32
      %p34 = scmp.ne.s32.totalorder %s26, %s29
      %p35 = scmp.eq.s32.totalorder %s16, 0
      %p36 = por %p34, %p35
      %p37 = scmp.ne.s32.totalorder %s26, %s29
      %p38 = scmp.eq.s32.totalorder %s21, 1
      %p39 = por %p37, %p38
      %p40 = scmp.ne.s32.totalorder %s29, %s30
      %p41 = scmp.eq.s32.totalorder %s21, 0
      %p42 = por %p40, %p41
      %p43 = scmp.ne.s32.totalorder %s29, %s30
      %p44 = scmp.eq.s32.totalorder %s22, 1
      %p45 = por %p43, %p44
      %p47 = scmp.ne.s32.totalorder %s30, %s46
      %p48 = scmp.eq.s32.totalorder %s22, 0
      %p49 = por %p47, %p48
      %s51 = sadd.s32 %s50, 1
      %p54 = scmp.eq.s32.totalorder %s16, 1
      %p55 = scmp.ne.s32.totalorder %s50, %s52
      %p56 = scmp.eq.s32.totalorder %s16, 0
      %p57 = por %p55, %p56
      %p58 = scmp.ne.s32.totalorder %s50, %s52
      %p59 = scmp.eq.s32.totalorder %s21, 1
      %p60 = por %p58, %p59
      %p61 = scmp.ne.s32.totalorder %s52, %s53
      %p62 = scmp.eq.s32.totalorder %s21, 0
      %p63 = por %p61, %p62
      %p64 = scmp.ne.s32.totalorder %s52, %s53
      %p65 = scmp.eq.s32.totalorder %s22, 1
      %p66 = por %p64, %p65
      %p68 = scmp.ne.s32.totalorder %s53, %s67
      %p69 = scmp.eq.s32.totalorder %s22, 0
      %p70 = por %p68, %p69
      %s72 = sadd.s32 %s71, 1
      %p75 = scmp.eq.s32.totalorder %s16, 1
      %p76 = scmp.ne.s32.totalorder %s71, %s73
      %p77 = scmp.eq.s32.totalorder %s16, 0
      %p78 = por %p76, %p77
      %p79 = scmp.ne.s32.totalorder %s71, %s73
      %p80 = scmp.eq.s32.totalorder %s21, 1
      %p81 = por %p79, %p80
      %p82 = scmp.ne.s32.totalorder %s73, %s74
      %p83 = scmp.eq.s32.totalorder %s21, 0
      %p84 = por %p82, %p83
      %p85 = scmp.ne.s32.totalorder %s73, %s74
      %p86 = scmp.eq.s32.totalorder %s22, 1
      %p87 = por %p85, %p86
      %p89 = scmp.ne.s32.totalorder %s74, %s88
      %p90 = scmp.eq.s32.totalorder %s22, 0
      %p91 = por %p89, %p90
      %s92 = ssub.s32 %s16, %s23
      %p93 = scmp.eq.s32.totalorder %s92, 0
      %s95 = sadd.s32 %s94, 1
      %s96 = scalar_select %p93, %s94, %s95
      %p99 = pneg %p93
      %p100 = scmp.eq.s32.totalorder %s16, 1
      %p101 = por %p99, %p100
      %p102 = scmp.ne.s32.totalorder %s94, %s97
      %p103 = scmp.eq.s32.totalorder %s16, 0
      %p104 = por %p102, %p103
      %p105 = scmp.ne.s32.totalorder %s94, %s97
      %p106 = scmp.eq.s32.totalorder %s21, 1
      %p107 = por %p105, %p106
      %p108 = scmp.ne.s32.totalorder %s97, %s98
      %p109 = scmp.eq.s32.totalorder %s21, 0
      %p110 = por %p108, %p109
      %p111 = scmp.ne.s32.totalorder %s97, %s98
      %p112 = scmp.eq.s32.totalorder %s22, 1
      %p113 = por %p111, %p112
      %p115 = scmp.ne.s32.totalorder %s98, %s114
      %p116 = scmp.eq.s32.totalorder %s22, 0
      %p117 = por %p115, %p116
      %p118 = scmp.le.s32.totalorder 1, %s16
      %p119 = scmp.lt.s32.totalorder %s16, 3
      %p120 = pnand %p118, %p119
      %p121 = pneg %p120
      // Predicated region
      $region9: #{tpu_custom_call.1} parent=5 // pred_check
        _
      $region10: #{tpu_custom_call.1} parent=5 // pred_check_branch
        %123 = sbr.rel (%p120) target = $region12
      $region11: #{tpu_custom_call.1} parent=5 // pred_region
        %s124 = ssub.s32 %s16, 1
        // Predicated region
        $region13: #{tpu_custom_call.1} parent=11 // pred_check
          %p125 = pneg %p63
        $region14: #{tpu_custom_call.1} parent=11 // pred_check_branch
          %127 = sbr.rel (%p125) target = $region16
        $region15: #{tpu_custom_call.1} parent=11 // pred_region
          %s129 = ssub.s32 8192, 8192
          %130 = vsyncadd [#allocation6], %s129
          %s131 = sshll.u32 [#allocation5], 4
          %s132 = int_to_ptr.vmem [resolvable:$true] %s131
          %137 = dma.hbm_to_vmem [thread:$0]  %s1, 8192, %s132, [#allocation6], 128, 128, 8
        $region16: #{tpu_custom_call.1} parent=11 // pred_fallthru
          _
        // Predicated region
        $region17: #{tpu_custom_call.1} parent=11 // pred_check
          %p138 = pneg %p84
        $region18: #{tpu_custom_call.1} parent=11 // pred_check_branch
          %140 = sbr.rel (%p138) target = $region20
        $region19: #{tpu_custom_call.1} parent=11 // pred_region
          _
        $region20: #{tpu_custom_call.1} parent=11 // pred_fallthru
          _
      $region12: #{tpu_custom_call.1} parent=5 // pred_fallthru
        _
      %p141 = scmp.lt.s32.totalorder %s16, 2
      // Predicated region
      $region21: #{tpu_custom_call.1} parent=5 // pred_check
        %p142 = pneg %p141
      $region22: #{tpu_custom_call.1} parent=5 // pred_check_branch
        %144 = sbr.rel (%p142) target = $region24
      $region23: #{tpu_custom_call.1} parent=5 // pred_region
        // Predicated region
        $region25: #{tpu_custom_call.1} parent=23 // pred_check
          %p145 = pneg %p36
        $region26: #{tpu_custom_call.1} parent=23 // pred_check_branch
          %147 = sbr.rel (%p145) target = $region28
        $region27: #{tpu_custom_call.1} parent=23 // pred_region
          %s148 = sand.u32 %s26, 1
          %s149 = scalar_lea.sflag [#allocation3], %s148
          %s150 = sand.u32 %s26, 1
          %s151 = smul.addr %s150, 64
          %s152 = scalar_lea.vmem [#allocation2], %s151
          %s153 = smul.u32 2, %s16
          %s154 = ssub.s32 3, %s153
          %p155 = scmp.lt.s32.totalorder %s154, 2
          %s156 = scalar_select %p155, %s154, 2
          %s157 = smul.u32 128, %s156
          %s158 = smul.u32 %s157, 4
          %s160 = ssub.s32 1024, %s158
          %161 = vsyncadd %s149, %s160
          %p162 = scmp.ne.s32.totalorder 0, %s158
          %s163 = smul.addr %s153, 4
          %s164 = smul.addr %s163, 128
          %s165 = scalar_lea.hbm %s0, %s164
          %s166 = smul.u32 32, %s156
          %s167 = sshll.u32 %s152, 4
          %s168 = int_to_ptr.vmem [resolvable:$true] %s167
          %s169 = sshll.u32 %s166, 4
          %173 = dma.hbm_to_vmem [thread:$0]  (%p162), %s165, %s169, %s168, %s149, 512, 512, 32
        $region28: #{tpu_custom_call.1} parent=23 // pred_fallthru
          _
      $region24: #{tpu_custom_call.1} parent=5 // pred_fallthru
        _
      %p174 = scmp.le.s32.totalorder 1, %s16
      %p175 = scmp.lt.s32.totalorder %s16, 3
      %p176 = pnand %p174, %p175
      %p177 = pneg %p176
      // Predicated region
      $region29: #{tpu_custom_call.1} parent=5 // pred_check
        _
      $region30: #{tpu_custom_call.1} parent=5 // pred_check_branch
        %179 = sbr.rel (%p176) target = $region32
      $region31: #{tpu_custom_call.1} parent=5 // pred_region
        %s180 = ssub.s32 %s16, 1
        %s181 = sand.u32 %s29, 1
        %s182 = scalar_lea.sflag [#allocation3], %s181
        %s183 = sand.u32 %s29, 1
        %s184 = smul.addr %s183, 64
        %s185 = scalar_lea.vmem [#allocation2], %s184
        // Predicated region
        $region33: #{tpu_custom_call.1} parent=31 // pred_check
          %p186 = pneg %p42
        $region34: #{tpu_custom_call.1} parent=31 // pred_check_branch
          %188 = sbr.rel (%p186) target = $region36
        $region35: #{tpu_custom_call.1} parent=31 // pred_region
          %189 = dma.done %s182, 1024
        $region36: #{tpu_custom_call.1} parent=31 // pred_fallthru
          _
        // Predicated region
        $region37: #{tpu_custom_call.1} parent=31 // pred_check
          %p190 = pneg %p63
        $region38: #{tpu_custom_call.1} parent=31 // pred_check_branch
          %192 = sbr.rel (%p190) target = $region40
        $region39: #{tpu_custom_call.1} parent=31 // pred_region
          %193 = dma.done [#allocation6], 8192
        $region40: #{tpu_custom_call.1} parent=31 // pred_fallthru
          _
        %s194 = sand.u32 %s29, 1
        %s195 = scalar_lea.sflag [#allocation3], %s194
        %s196 = sand.u32 %s29, 1
        %s197 = smul.addr %s196, 64
        %s198 = scalar_lea.vmem [#allocation2], %s197
        %p199 = pneg %p42
        %p200 = pneg %p39
        %p201 = pneg %p63
        %p202 = pneg %p60
        %p203 = pneg %p84
        %p204 = pneg %p81
        %p205 = pneg %p110
        %p206 = pneg %p107
        %s207 = sand.u32 %s97, 1
        %s208 = scalar_lea.sflag [#allocation4], %s207
        %s209 = sand.u32 %s97, 1
        %s210 = smul.addr %s209, 16
        %s211 = scalar_lea.vmem [#allocation7], %s210
        %s212 = smul.u32 2, %s21
        %s213 = ssub.s32 3, %s212
        %p214 = scmp.lt.s32.totalorder %s213, 2
        %s215 = scalar_select %p214, %s213, 2
        %s216 = smul.u32 128, %s215
        %s217 = smul.u32 %s216, 4
        %s218 = smul.u32 2, %s21
        %s219 = ssub.s32 3, %s218
        %p220 = scmp.lt.s32.totalorder %s219, 2
        %s221 = scalar_select %p220, %s219, 2
        %s222 = smul.u32 128, %s221
        %v223 = vld [vmem:[%s185] sm:$0xff]
        %v224 = vld [vmem:[%s185 + $0x8] sm:$0xff]
        %v225 = vld [vmem:[%s185 + $0x10] sm:$0xff]
        %v226 = vld [vmem:[%s185 + $0x18] sm:$0xff]
        %v227 = vld [vmem:[%s185 + $0x20] sm:$0xff]
        %v228 = vld [vmem:[%s185 + $0x28] sm:$0xff]
        %v229 = vld [vmem:[%s185 + $0x30] sm:$0xff]
        %v230 = vld [vmem:[%s185 + $0x38] sm:$0xff]
        %v231 = vld [vmem:[#allocation5] sm:$0xff]
        %v232 = vld [vmem:[#allocation5 + $0x8] sm:$0xff]
        %v233 = vld [vmem:[#allocation5 + $0x10] sm:$0xff]
        %v234 = vld [vmem:[#allocation5 + $0x18] sm:$0xff]
        %v235 = vld [vmem:[#allocation5 + $0x20] sm:$0xff]
        %v236 = vld [vmem:[#allocation5 + $0x28] sm:$0xff]
        %v237 = vld [vmem:[#allocation5 + $0x30] sm:$0xff]
        %v238 = vld [vmem:[#allocation5 + $0x38] sm:$0xff]
        %v239 = vld [vmem:[#allocation5 + $0x40] sm:$0xff]
        %v240 = vld [vmem:[#allocation5 + $0x48] sm:$0xff]
        %v241 = vld [vmem:[#allocation5 + $0x50] sm:$0xff]
        %v242 = vld [vmem:[#allocation5 + $0x58] sm:$0xff]
        %v243 = vld [vmem:[#allocation5 + $0x60] sm:$0xff]
        %v244 = vld [vmem:[#allocation5 + $0x68] sm:$0xff]
        %v245 = vld [vmem:[#allocation5 + $0x70] sm:$0xff]
        %v246 = vld [vmem:[#allocation5 + $0x78] sm:$0xff]
        %v247 = vld [vmem:[#allocation5 + $0x80] sm:$0xff]
        %v248 = vld [vmem:[#allocation5 + $0x88] sm:$0xff]
        %v249 = vld [vmem:[#allocation5 + $0x90] sm:$0xff]
        %v250 = vld [vmem:[#allocation5 + $0x98] sm:$0xff]
        %v251 = vld [vmem:[#allocation5 + $0xa0] sm:$0xff]
        %v252 = vld [vmem:[#allocation5 + $0xa8] sm:$0xff]
        %v253 = vld [vmem:[#allocation5 + $0xb0] sm:$0xff]
        %v254 = vld [vmem:[#allocation5 + $0xb8] sm:$0xff]
        %v255 = vld [vmem:[#allocation5 + $0xc0] sm:$0xff]
        %v256 = vld [vmem:[#allocation5 + $0xc8] sm:$0xff]
        %v257 = vld [vmem:[#allocation5 + $0xd0] sm:$0xff]
        %v258 = vld [vmem:[#allocation5 + $0xd8] sm:$0xff]
        %v259 = vld [vmem:[#allocation5 + $0xe0] sm:$0xff]
        %v260 = vld [vmem:[#allocation5 + $0xe8] sm:$0xff]
        %v261 = vld [vmem:[#allocation5 + $0xf0] sm:$0xff]
        %v262 = vld [vmem:[#allocation5 + $0xf8] sm:$0xff]
        %v263 = vld [vmem:[#allocation5 + $0x100] sm:$0xff]
        %v264 = vld [vmem:[#allocation5 + $0x108] sm:$0xff]
        %v265 = vld [vmem:[#allocation5 + $0x110] sm:$0xff]
        %v266 = vld [vmem:[#allocation5 + $0x118] sm:$0xff]
        %v267 = vld [vmem:[#allocation5 + $0x120] sm:$0xff]
        %v268 = vld [vmem:[#allocation5 + $0x128] sm:$0xff]
        %v269 = vld [vmem:[#allocation5 + $0x130] sm:$0xff]
        %v270 = vld [vmem:[#allocation5 + $0x138] sm:$0xff]
        %v271 = vld [vmem:[#allocation5 + $0x140] sm:$0xff]
        %v272 = vld [vmem:[#allocation5 + $0x148] sm:$0xff]
        %v273 = vld [vmem:[#allocation5 + $0x150] sm:$0xff]
        %v274 = vld [vmem:[#allocation5 + $0x158] sm:$0xff]
        %v275 = vld [vmem:[#allocation5 + $0x160] sm:$0xff]
        %v276 = vld [vmem:[#allocation5 + $0x168] sm:$0xff]
        %v277 = vld [vmem:[#allocation5 + $0x170] sm:$0xff]
        %v278 = vld [vmem:[#allocation5 + $0x178] sm:$0xff]
        %v279 = vld [vmem:[#allocation5 + $0x180] sm:$0xff]
        %v280 = vld [vmem:[#allocation5 + $0x188] sm:$0xff]
        %v281 = vld [vmem:[#allocation5 + $0x190] sm:$0xff]
        %v282 = vld [vmem:[#allocation5 + $0x198] sm:$0xff]
        %v283 = vld [vmem:[#allocation5 + $0x1a0] sm:$0xff]
        %v284 = vld [vmem:[#allocation5 + $0x1a8] sm:$0xff]
        %v285 = vld [vmem:[#allocation5 + $0x1b0] sm:$0xff]
        %v286 = vld [vmem:[#allocation5 + $0x1b8] sm:$0xff]
        %v287 = vld [vmem:[#allocation5 + $0x1c0] sm:$0xff]
        %v288 = vld [vmem:[#allocation5 + $0x1c8] sm:$0xff]
        %v289 = vld [vmem:[#allocation5 + $0x1d0] sm:$0xff]
        %v290 = vld [vmem:[#allocation5 + $0x1d8] sm:$0xff]
        %v291 = vld [vmem:[#allocation5 + $0x1e0] sm:$0xff]
        %v292 = vld [vmem:[#allocation5 + $0x1e8] sm:$0xff]
        %v293 = vld [vmem:[#allocation5 + $0x1f0] sm:$0xff]
        %v294 = vld [vmem:[#allocation5 + $0x1f8] sm:$0xff]
        %v295 = vld [vmem:[%s2] sm:$0x1]
        %v297 = vlaneseq
        %v298 = vshrl.u32 %v297, 7
        %v299 = vsub.s32 0, %v298
        %v300 = vrot.slane %v295, %v299
        %302 = vmatprep.subr.mxu0 0.0
        %303 = vmatpush1.msra.mxu0 %v231
        %304 = vmatprep.subr.mxu0 0.0
        %305 = vmatpush1.msra.mxu0 %v232
        %306 = vmatprep.subr.mxu0 0.0
        %307 = vmatpush1.msra.mxu0 %v233
        %308 = vmatprep.subr.mxu0 0.0
        %309 = vmatpush1.msra.mxu0 %v234
        %310 = vmatprep.subr.mxu0 0.0
        %311 = vmatpush1.msra.mxu0 %v235
        %312 = vmatprep.subr.mxu0 0.0
        %313 = vmatpush1.msra.mxu0 %v236
        %314 = vmatprep.subr.mxu0 0.0
        %315 = vmatpush1.msra.mxu0 %v237
        %316 = vmatprep.subr.mxu0 0.0
        %317 = vmatpush1.msra.mxu0 %v238
        %318 = vmatprep.subr.mxu0 0.0
        %319 = vmatpush1.msra.mxu0 %v239
        %320 = vmatprep.subr.mxu0 0.0
        %321 = vmatpush1.msra.mxu0 %v240
        %322 = vmatprep.subr.mxu0 0.0
        %323 = vmatpush1.msra.mxu0 %v241
        %324 = vmatprep.subr.mxu0 0.0
        %325 = vmatpush1.msra.mxu0 %v242
        %326 = vmatprep.subr.mxu0 0.0
        %327 = vmatpush1.msra.mxu0 %v243
        %328 = vmatprep.subr.mxu0 0.0
        %329 = vmatpush1.msra.mxu0 %v244
        %330 = vmatprep.subr.mxu0 0.0
        %331 = vmatpush1.msra.mxu0 %v245
        %332 = vmatprep.subr.mxu0 0.0
        %333 = vmatpush1.msra.mxu0 %v246
        %334 = vmatprep.subr.mxu0 0.0
        %335 = vmatpush1.msra.mxu0 %v247
        %336 = vmatprep.subr.mxu0 0.0
        %337 = vmatpush1.msra.mxu0 %v248
        %338 = vmatprep.subr.mxu0 0.0
        %339 = vmatpush1.msra.mxu0 %v249
        %340 = vmatprep.subr.mxu0 0.0
        %341 = vmatpush1.msra.mxu0 %v250
        %342 = vmatprep.subr.mxu0 0.0
        %343 = vmatpush1.msra.mxu0 %v251
        %344 = vmatprep.subr.mxu0 0.0
        %345 = vmatpush1.msra.mxu0 %v252
        %346 = vmatprep.subr.mxu0 0.0
        %347 = vmatpush1.msra.mxu0 %v253
        %348 = vmatprep.subr.mxu0 0.0
        %349 = vmatpush1.msra.mxu0 %v254
        %350 = vmatprep.subr.mxu0 0.0
        %351 = vmatpush1.msra.mxu0 %v255
        %352 = vmatprep.subr.mxu0 0.0
        %353 = vmatpush1.msra.mxu0 %v256
        %354 = vmatprep.subr.mxu0 0.0
        %355 = vmatpush1.msra.mxu0 %v257
        %356 = vmatprep.subr.mxu0 0.0
        %357 = vmatpush1.msra.mxu0 %v258
        %358 = vmatprep.subr.mxu0 0.0
        %359 = vmatpush1.msra.mxu0 %v259
        %360 = vmatprep.subr.mxu0 0.0
        %361 = vmatpush1.msra.mxu0 %v260
        %362 = vmatprep.subr.mxu0 0.0
        %363 = vmatpush1.msra.mxu0 %v261
        %364 = vmatprep.subr.mxu0 0.0
        %365 = vmatpush1.msra.mxu0 %v262
        %366 = vmatprep.mubr.f32.mxu0 %v224
        %367 = vmatmul.mubr.f32.gmra.mrb[0].mxu0 %v223
        %v368 = vpop.f32.mrb[0].mxu0
        %v369 = vadd.f32 %v300, %v368
        %v370 = vpop.f32.mrb[0].mxu0
        %371 = vmatprep.mubr.f32.mxu0 %v228
        %372 = vmatmul.mubr.f32.gmra.mrb[0].mxu0 %v227
        %v373 = vpop.f32.mrb[0].mxu0
        %v374 = vadd.f32 %v300, %v373
        %v375 = vpop.f32.mrb[0].mxu0
        %376 = vdwg.mxu0
        %377 = vmatprep.subr.mxu0 0.0
        %378 = vmatpush1.msra.mxu0 %v263
        %379 = vmatprep.subr.mxu0 0.0
        %380 = vmatpush1.msra.mxu0 %v264
        %381 = vmatprep.subr.mxu0 0.0
        %382 = vmatpush1.msra.mxu0 %v265
        %383 = vmatprep.subr.mxu0 0.0
        %384 = vmatpush1.msra.mxu0 %v266
        %385 = vmatprep.subr.mxu0 0.0
        %386 = vmatpush1.msra.mxu0 %v267
        %387 = vmatprep.subr.mxu0 0.0
        %388 = vmatpush1.msra.mxu0 %v268
        %389 = vmatprep.subr.mxu0 0.0
        %390 = vmatpush1.msra.mxu0 %v269
        %391 = vmatprep.subr.mxu0 0.0
        %392 = vmatpush1.msra.mxu0 %v270
        %393 = vmatprep.subr.mxu0 0.0
        %394 = vmatpush1.msra.mxu0 %v271
        %395 = vmatprep.subr.mxu0 0.0
        %396 = vmatpush1.msra.mxu0 %v272
        %397 = vmatprep.subr.mxu0 0.0
        %398 = vmatpush1.msra.mxu0 %v273
        %399 = vmatprep.subr.mxu0 0.0
        %400 = vmatpush1.msra.mxu0 %v274
        %401 = vmatprep.subr.mxu0 0.0
        %402 = vmatpush1.msra.mxu0 %v275
        %403 = vmatprep.subr.mxu0 0.0
        %404 = vmatpush1.msra.mxu0 %v276
        %405 = vmatprep.subr.mxu0 0.0
        %406 = vmatpush1.msra.mxu0 %v277
        %407 = vmatprep.subr.mxu0 0.0
        %408 = vmatpush1.msra.mxu0 %v278
        %409 = vmatprep.subr.mxu0 0.0
        %410 = vmatpush1.msra.mxu0 %v279
        %411 = vmatprep.subr.mxu0 0.0
        %412 = vmatpush1.msra.mxu0 %v280
        %413 = vmatprep.subr.mxu0 0.0
        %414 = vmatpush1.msra.mxu0 %v281
        %415 = vmatprep.subr.mxu0 0.0
        %416 = vmatpush1.msra.mxu0 %v282
        %417 = vmatprep.subr.mxu0 0.0
        %418 = vmatpush1.msra.mxu0 %v283
        %419 = vmatprep.subr.mxu0 0.0
        %420 = vmatpush1.msra.mxu0 %v284
        %421 = vmatprep.subr.mxu0 0.0
        %422 = vmatpush1.msra.mxu0 %v285
        %423 = vmatprep.subr.mxu0 0.0
        %424 = vmatpush1.msra.mxu0 %v286
        %425 = vmatprep.subr.mxu0 0.0
        %426 = vmatpush1.msra.mxu0 %v287
        %427 = vmatprep.subr.mxu0 0.0
        %428 = vmatpush1.msra.mxu0 %v288
        %429 = vmatprep.subr.mxu0 0.0
        %430 = vmatpush1.msra.mxu0 %v289
        %431 = vmatprep.subr.mxu0 0.0
        %432 = vmatpush1.msra.mxu0 %v290
        %433 = vmatprep.subr.mxu0 0.0
        %434 = vmatpush1.msra.mxu0 %v291
        %435 = vmatprep.subr.mxu0 0.0
        %436 = vmatpush1.msra.mxu0 %v292
        %437 = vmatprep.subr.mxu0 0.0
        %438 = vmatpush1.msra.mxu0 %v293
        %439 = vmatprep.subr.mxu0 0.0
        %440 = vmatpush1.msra.mxu0 %v294
        %441 = vmatprep.mubr.f32.mxu0 %v226
        %442 = vmatmul.mubr.f32.gmra.mrb[0].mxu0 %v225
        %v443 = vpop.f32.mrb[0].mxu0
        %v444 = vadd.f32 %v369, %v443
        %v445 = vpop.f32.mrb[0].mxu0
        %446 = vmatprep.mubr.f32.mxu0 %v230
        %447 = vmatmul.mubr.f32.gmra.mrb[0].mxu0 %v229
        %v448 = vpop.f32.mrb[0].mxu0
        %v449 = vadd.f32 %v374, %v448
        %v450 = vpop.f32.mrb[0].mxu0
        %451 = vdwg.mxu0
        %v452 = vxor.u32 %v444, 2147483648
        %v453 = vxor.u32 %v449, 2147483648
        %v454 = vmul.f32 %v452, 1.442695
        %v455 = vpow.pop %v454
        %v456 = vmul.f32 %v453, 1.442695
        %v457 = vpow.pop %v456
        %v458 = vadd.f32 %v455, 1.0
        %v459 = vadd.f32 %v457, 1.0
        %v460 = vrcp.pop %v458
        %v461 = vmul.f32 1.0, %v460
        %v462 = vrcp.pop %v459
        %v463 = vmul.f32 1.0, %v462
        %464 = vst [vmem:[%s211] sm:$0xff] %v461
        %465 = vst [vmem:[%s211 + $0x8] sm:$0xff] %v463
        %s466 = sand.u32 %s97, 1
        %s467 = scalar_lea.sflag [#allocation4], %s466
        %s468 = sand.u32 %s97, 1
        %s469 = smul.addr %s468, 16
        %s470 = scalar_lea.vmem [#allocation7], %s469
        // Predicated region
        $region41: #{tpu_custom_call.1} parent=31 // pred_check
          %p471 = pneg %p107
        $region42: #{tpu_custom_call.1} parent=31 // pred_check_branch
          %473 = sbr.rel (%p471) target = $region44
        $region43: #{tpu_custom_call.1} parent=31 // pred_region
          %s474 = smul.u32 2, %s21
          %s475 = ssub.s32 3, %s474
          %p476 = scmp.lt.s32.totalorder %s475, 2
          %s477 = scalar_select %p476, %s475, 2
          %s478 = smul.u32 128, %s477
          %s480 = ssub.s32 256, %s478
          %481 = vsyncadd %s467, %s480
          %p482 = scmp.ne.s32.totalorder 0, %s478
          %s483 = smul.addr %s474, 128
          %s484 = scalar_lea.hbm %s3, %s483
          %s485 = smul.u32 8, %s477
          %s486 = sshll.u32 %s470, 4
          %s487 = int_to_ptr.vmem [resolvable:$true] %s486
          %s488 = sshll.u32 %s485, 4
          %492 = dma.vmem_to_hbm [thread:$0]  (%p482), %s487, %s488, %s484, %s467, 128, 128, 8
        $region44: #{tpu_custom_call.1} parent=31 // pred_fallthru
          _
      $region32: #{tpu_custom_call.1} parent=5 // pred_fallthru
        _
      %p493 = scmp.le.s32.totalorder 2, %s16
      // Predicated region
      $region45: #{tpu_custom_call.1} parent=5 // pred_check
        %p494 = pneg %p493
      $region46: #{tpu_custom_call.1} parent=5 // pred_check_branch
        %496 = sbr.rel (%p494) target = $region48
      $region47: #{tpu_custom_call.1} parent=5 // pred_region
        %s497 = ssub.s32 %s16, 2
        // Predicated region
        $region49: #{tpu_custom_call.1} parent=47 // pred_check
          %p498 = pneg %p113
        $region50: #{tpu_custom_call.1} parent=47 // pred_check_branch
          %500 = sbr.rel (%p498) target = $region52
        $region51: #{tpu_custom_call.1} parent=47 // pred_region
          %s501 = sand.u32 %s98, 1
          %s502 = scalar_lea.sflag [#allocation4], %s501
          %s503 = sand.u32 %s98, 1
          %s504 = smul.addr %s503, 16
          %s505 = scalar_lea.vmem [#allocation7], %s504
          %506 = dma.done %s502, 256
        $region52: #{tpu_custom_call.1} parent=47 // pred_fallthru
          _
      $region48: #{tpu_custom_call.1} parent=5 // pred_fallthru
        _
    $region6: #{tpu_custom_call.1} parent=1 // loop_footer
      %s20 = sadd.s32 1, %s16
    $region7: #{tpu_custom_call.1} parent=1 // loop_footer_branch
      %15 = sbr.rel target = $region3
    $region8: #{tpu_custom_call.1} parent=1 // loop_exit
      _
    %507 = vsyncpa [#allocation3], 1
    %s508 = scalar_lea.sflag [#allocation3], 1
    %509 = vsyncpa %s508, 1
    %510 = vsyncpa [#allocation6], 1
    %511 = vsyncpa [#allocation4], 1
    %s512 = scalar_lea.sflag [#allocation4], 1
    %513 = vsyncpa %s512, 1

</llo_original>
